<compile_context>
chip_gen: v5e
topology: v5e:2x2
jax: 0.10.0
libtpu: 0.0.40
codegen_flags: <defaults>
</compile_context>

<pallas_src>
import jax
import jax.numpy as jnp
from jax.experimental import pallas as pl
from jax.experimental.pallas import tpu as pltpu


def _tile4x4_kernel(x_ref, o_ref):
    # x_ref: (NBC, H, W) input block.
    # o_ref: (NBC, R_blk, H, 4W) output block, where axis 1 indexes the 4
    #        H-replicas of the (H, 4W) row slab.
    x = x_ref[...]
    # W-replication once -> lane axis becomes 4W wide, single aligned slab.
    row = jnp.concatenate([x, x, x, x], axis=-1)              # (NBC, H, 4W)
    # H-replication is a broadcast along the (non-minor) replica axis.
    o_ref[...] = jnp.broadcast_to(row[:, None, :, :], o_ref.shape)


def empty_model_forward(x: jax.Array) -> jax.Array:
    B, C, H, W = x.shape
    BC = B * C
    itemsize = jnp.dtype(x.dtype).itemsize

    # Collapse (B, C) into one grid axis (free reshape of contiguous array).
    xf = x.reshape(BC, H, W)

    # ---- generation-aware sizing -------------------------------------------
    try:
        vmem_cap = int(pltpu.get_tpu_info().vmem_capacity_bytes)
    except Exception:
        vmem_cap = 64 << 20  # conservative: v7x per-TC VMEM
    # Budget for the double-buffered (input + output) blocks:
    #   v7x (64 MiB physical) -> 32 MiB;  v5e/v6e (128 MiB) -> 48 MiB.
    budget = min(vmem_cap // 2, 48 << 20)
    target_out_block = 4 << 20  # aim for ~2-8 MiB output blocks

    bytes_per_slice_out = 16 * H * W * itemsize  # one (4H,4W) slice

    def fits(nbc, r_blk):
        out_b = nbc * r_blk * H * (4 * W) * itemsize
        in_b = nbc * H * W * itemsize
        return 2 * (out_b + in_b) <= budget

    # Start with all 4 replicas per step and as many BC slices as hit the
    # target output-block size.
    R_blk = 4
    NBC = max(1, min(BC, target_out_block // bytes_per_slice_out))
    while NBC > 1 and not fits(NBC, R_blk):
        NBC = max(1, NBC // 2)
    if not fits(NBC, R_blk):
        # One slice with all 4 replicas is already too big: split the
        # replication axis across grid steps instead.
        R_blk = 1
    # NOTE: for extremely large H*W (a single (1,1,H,4W) block exceeding the
    # VMEM budget) an extra H/W tile axis would be needed; we degrade
    # gracefully by just raising vmem_limit below (not hit at these shapes).

    # Feed both v7x TensorCores: guarantee >= 2 parallel grid steps if possible.
    n_bc_blocks = pl.cdiv(BC, NBC)
    if n_bc_blocks * (4 // R_blk) < 2:
        if BC >= 2:
            NBC = pl.cdiv(BC, 2)
            n_bc_blocks = pl.cdiv(BC, NBC)
        else:
            R_blk = min(R_blk, 2)
    n_rep = 4 // R_blk

    out_block_bytes = NBC * R_blk * H * (4 * W) * itemsize
    in_block_bytes = NBC * H * W * itemsize
    needed = 2 * (out_block_bytes + in_block_bytes)  # double-buffered
    vmem_limit = int(min(max(needed + (2 << 20), 8 << 20),
                         vmem_cap - (4 << 20)))

    # Output declared as (BC, 4, H, 4W): a free row-major view of
    # (BC, 4H, 4W); each grid step writes a fully contiguous HBM region.
    out = pl.pallas_call(
        _tile4x4_kernel,
        out_shape=jax.ShapeDtypeStruct((BC, 4, H, 4 * W), x.dtype),
        grid=(n_bc_blocks, n_rep),
        in_specs=[pl.BlockSpec((NBC, H, W), lambda i, r: (i, 0, 0))],
        out_specs=pl.BlockSpec((NBC, R_blk, H, 4 * W),
                               lambda i, r: (i, r, 0, 0)),
        compiler_params=pltpu.CompilerParams(
            dimension_semantics=("parallel", "parallel"),
            vmem_limit_bytes=vmem_limit,
        ),
        cost_estimate=pl.CostEstimate(
            flops=0,
            transcendentals=0,
            bytes_accessed=17 * x.size * itemsize,  # 1x read + 16x write
        ),
    )(xf)

    # Free reshape back to the PyTorch layout.
    return out.reshape(B, C, 4 * H, 4 * W)


if __name__ == "__main__":
    key = jax.random.PRNGKey(0)
    x = jax.random.normal(key, (2, 4, 16, 16), dtype=jnp.float32)

    out = jax.block_until_ready(empty_model_forward(x))

    # Reference: plain JAX concat, matching torch.cat semantics.
    ref = jnp.concatenate([x, x, x, x], axis=-2)
    ref = jnp.concatenate([ref, ref, ref, ref], axis=-1)

    assert out.shape == (2, 4, 64, 64), out.shape
    assert out.dtype == x.dtype
    assert jnp.array_equal(out, ref), "mismatch vs reference"

    print("KERNEL_OK")
</pallas_src>

<mosaic_0001>
module attributes {stable_mosaic.version = 11 : i64} {
  func.func @_tile4x4_kernel(%arg0: i32, %arg1: i32, %arg2: memref<4x16x16xf32, #tpu.memory_space<vmem>>, %arg3: memref<4x4x16x64xf32, #tpu.memory_space<vmem>>) attributes {dimension_semantics = [#tpu.dimension_semantics<parallel>, #tpu.dimension_semantics<parallel>], iteration_bounds = array<i64: 2, 1>, scalar_prefetch = 0 : i64, scratch_operands = 0 : i64, tpu.core_type = #tpu.core_type<tc>, window_params = [{transform_indices = @transform_0, window_bounds = array<i64: 4, 16, 16>}, {transform_indices = @transform_1, window_bounds = array<i64: 4, 4, 16, 64>}]} {
    %c0 = arith.constant 0 : index
    %c0_0 = arith.constant 0 : index
    %c0_1 = arith.constant 0 : index
    %0 = vector.load %arg2[%c0, %c0_0, %c0_1] : memref<4x16x16xf32, #tpu.memory_space<vmem>>, vector<4x16x16xf32>
    %1 = tpu.concatenate %0, %0, %0, %0 in 2 : vector<4x16x16xf32>, vector<4x16x16xf32>, vector<4x16x16xf32>, vector<4x16x16xf32> -> vector<4x16x64xf32>
    %2 = vector.shape_cast %1 : vector<4x16x64xf32> to vector<4x1x16x64xf32>
    %3 = vector.shape_cast %2 : vector<4x1x16x64xf32> to vector<4x1x16x64xf32>
    %4 = vector.broadcast %3 : vector<4x1x16x64xf32> to vector<4x4x16x64xf32>
    %c0_2 = arith.constant 0 : index
    %c0_3 = arith.constant 0 : index
    %c0_4 = arith.constant 0 : index
    %c0_5 = arith.constant 0 : index
    %5 = vector.load %arg3[%c0_2, %c0_3, %c0_4, %c0_5] : memref<4x4x16x64xf32, #tpu.memory_space<vmem>>, vector<4x4x16x64xf32>
    tpu.vector_store %arg3[%c0_2, %c0_3, %c0_4, %c0_5], %4 {strides = array<i32>} : memref<4x4x16x64xf32, #tpu.memory_space<vmem>>, vector<4x4x16x64xf32>,
    return
  }
  func.func @transform_0(%arg0: i32, %arg1: i32) -> (i32, i32, i32) {
    %c0_i32 = arith.constant 0 : i32
    %c0_i32_0 = arith.constant 0 : i32
    %c0_i32_1 = arith.constant 0 : i32
    return %arg0, %c0_i32, %c0_i32_0 : i32, i32, i32
  }
  func.func @transform_1(%arg0: i32, %arg1: i32) -> (i32, i32, i32, i32) {
    %c0_i32 = arith.constant 0 : i32
    %c0_i32_0 = arith.constant 0 : i32
    %c0_i32_1 = arith.constant 0 : i32
    return %arg0, %arg1, %c0_i32, %c0_i32_0 : i32, i32, i32, i32
  }
}

</mosaic_0001>

<llo_original>
// kernel: tpu_custom_call.1
$region0: #{tpu_custom_call.1}
  #allocation0 [shape = 'u32[]', space=smem, size = 0x4, offset = 0x4, fixed_abs, tag = 'smem constant byte address 0x4 - core index']
  #allocation1 [shape = 'u32[72,128]{1,0:T(1,128)}', space=vmem, size = 0x9000, scoped, tag = 'internal scratch']
  %s0 = inlined_call_operand.hbm [shape: f32[8,16,16], index: 0, kind: input, shape index: {}]
  %s1 = inlined_call_operand.hbm [shape: f32[8,4,16,64], index: 1, kind: output, shape index: {}]
  %s2 = sld [smem:[#allocation0]]
  $region41: #{tpu_custom_call.1} parent=0
    _
  %s4 = ssub.s32 1, %s2
  %s5 = scalar_select 0, %s4, %s2
  $region1: #{tpu_custom_call.1} parent=0
    #allocation2 [shape = 'u8[65536]{0}', space=vmem, size = 0x10000, scoped, tag = 'input window, operand 0']
    #allocation3 [shape = 's32[2]{0}', space=sflag, size = 0x8, scoped, tag = 'scoped memory for tpu_custom_call.1']
    #allocation4 [shape = 's32[2]{0}', space=sflag, size = 0x8, scoped, tag = 'scoped memory for tpu_custom_call.1']
    #allocation5 [shape = 'u8[262144]{0}', space=vmem, size = 0x40000, scoped, tag = 'output window, operand 0']
    %6 = vsyncpa [#allocation3], 0
    %s7 = scalar_lea.sflag [#allocation3], 1
    %8 = vsyncpa %s7, 0
    %9 = vsyncpa [#allocation4], 0
    %s10 = scalar_lea.sflag [#allocation4], 1
    %11 = vsyncpa %s10, 0
    loop: start=0, step=1, limit=4
    $region2: #{tpu_custom_call.1} parent=1 // loop_pre_header
      _
    $region3: #{tpu_custom_call.1} parent=1 // loop_header
      %s13 = sphi 0, %s17
      %p14 = scmp.ge.s32.totalorder %s13, 4
      %s20 = sphi 0, %s32
      %s21 = sphi 0, %s28
      %s22 = sphi 0, %s20
      %s23 = sphi 0, %s21
      %s24 = sphi 0, %s22
      %s25 = sphi 0, %s23
      %s35 = sphi 0, %s37
      %s38 = sphi 0, %s35
      %s39 = sphi 0, %s38
      %s55 = sphi 0, %s39
      %s63 = sphi 0, %s65
      %s66 = sphi 0, %s63
      %s67 = sphi 0, %s66
      %s83 = sphi 0, %s67
    $region4: #{tpu_custom_call.1} parent=1 // loop_header_branch
      %16 = sbr.rel (%p14) target = $region8
    $region5: #{tpu_custom_call.1} parent=1 // loop_body
      %s18 = ssub.s32 %s13, 1
      %s19 = ssub.s32 %s13, 2
      %s26 = sadd.s32 1, %s21
      %p27 = scmp.ge.s32.totalorder %s26, 1
      %s28 = scalar_select %p27, 0, %s26
      %s29 = sadd.s32 1, %s20
      %s30 = scalar_select %p27, %s29, %s20
      %p31 = scmp.ge.s32.totalorder %s30, 2
      %s32 = scalar_select %p31, 0, %s30
      %s33 = ssub.s32 %s20, %s32
      %p34 = scmp.eq.s32.totalorder %s33, 0
      %s36 = sadd.s32 %s35, 1
      %s37 = scalar_select %p34, %s35, %s36
      %p40 = pneg %p34
      %p41 = scmp.eq.s32.totalorder %s13, 1
      %p42 = por %p40, %p41
      %p43 = scmp.ne.s32.totalorder %s35, %s38
      %p44 = scmp.eq.s32.totalorder %s13, 0
      %p45 = por %p43, %p44
      %p46 = scmp.ne.s32.totalorder %s35, %s38
      %p47 = scmp.eq.s32.totalorder %s18, 1
      %p48 = por %p46, %p47
      %p49 = scmp.ne.s32.totalorder %s38, %s39
      %p50 = scmp.eq.s32.totalorder %s18, 0
      %p51 = por %p49, %p50
      %p52 = scmp.ne.s32.totalorder %s38, %s39
      %p53 = scmp.eq.s32.totalorder %s19, 1
      %p54 = por %p52, %p53
      %p56 = scmp.ne.s32.totalorder %s39, %s55
      %p57 = scmp.eq.s32.totalorder %s19, 0
      %p58 = por %p56, %p57
      %s59 = ssub.s32 %s20, %s32
      %s60 = ssub.s32 %s21, %s28
      %s61 = sor.u32 %s59, %s60
      %p62 = scmp.eq.s32.totalorder %s61, 0
      %s64 = sadd.s32 %s63, 1
      %s65 = scalar_select %p62, %s63, %s64
      %p68 = pneg %p62
      %p69 = scmp.eq.s32.totalorder %s13, 1
      %p70 = por %p68, %p69
      %p71 = scmp.ne.s32.totalorder %s63, %s66
      %p72 = scmp.eq.s32.totalorder %s13, 0
      %p73 = por %p71, %p72
      %p74 = scmp.ne.s32.totalorder %s63, %s66
      %p75 = scmp.eq.s32.totalorder %s18, 1
      %p76 = por %p74, %p75
      %p77 = scmp.ne.s32.totalorder %s66, %s67
      %p78 = scmp.eq.s32.totalorder %s18, 0
      %p79 = por %p77, %p78
      %p80 = scmp.ne.s32.totalorder %s66, %s67
      %p81 = scmp.eq.s32.totalorder %s19, 1
      %p82 = por %p80, %p81
      %p84 = scmp.ne.s32.totalorder %s67, %s83
      %p85 = scmp.eq.s32.totalorder %s19, 0
      %p86 = por %p84, %p85
      %p87 = scmp.le.s32.totalorder 1, %s13
      %p88 = scmp.lt.s32.totalorder %s13, 3
      %p89 = pnand %p87, %p88
      %p90 = pneg %p89
      // Predicated region
      $region9: #{tpu_custom_call.1} parent=5 // pred_check
        _
      $region10: #{tpu_custom_call.1} parent=5 // pred_check_branch
        %92 = sbr.rel (%p89) target = $region12
      $region11: #{tpu_custom_call.1} parent=5 // pred_region
        %s93 = ssub.s32 %s13, 1
      $region12: #{tpu_custom_call.1} parent=5 // pred_fallthru
        _
      %p94 = scmp.lt.s32.totalorder %s13, 2
      // Predicated region
      $region13: #{tpu_custom_call.1} parent=5 // pred_check
        %p95 = pneg %p94
      $region14: #{tpu_custom_call.1} parent=5 // pred_check_branch
        %97 = sbr.rel (%p95) target = $region16
      $region15: #{tpu_custom_call.1} parent=5 // pred_region
        // Predicated region
        $region17: #{tpu_custom_call.1} parent=15 // pred_check
          %p98 = pneg %p45
        $region18: #{tpu_custom_call.1} parent=15 // pred_check_branch
          %100 = sbr.rel (%p98) target = $region20
        $region19: #{tpu_custom_call.1} parent=15 // pred_region
          %s101 = sand.u32 %s35, 1
          %s102 = scalar_lea.sflag [#allocation3], %s101
          %s103 = sand.u32 %s35, 1
          %s104 = smul.addr %s103, 64
          %s105 = scalar_lea.vmem [#allocation2], %s104
          %s106 = smul.u32 4, %s20
          %108 = vsyncadd %s102, 0
          %s109 = smul.addr %s106, 2
          %s110 = smul.addr %s109, 8
          %s111 = scalar_lea.hbm %s0, %s110
          %s112 = sshll.u32 %s111, 4
          %s113 = int_to_ptr.hbm [resolvable:$true] %s112
          %s114 = sshll.u32 %s105, 4
          %s115 = int_to_ptr.vmem [resolvable:$true] %s114
          %120 = dma.hbm_to_vmem [thread:$0]  %s113, 1024, %s115, %s102, 128, 128, 8
        $region20: #{tpu_custom_call.1} parent=15 // pred_fallthru
          _
      $region16: #{tpu_custom_call.1} parent=5 // pred_fallthru
        _
      %p121 = scmp.le.s32.totalorder 1, %s13
      %p122 = scmp.lt.s32.totalorder %s13, 3
      %p123 = pnand %p121, %p122
      %p124 = pneg %p123
      // Predicated region
      $region21: #{tpu_custom_call.1} parent=5 // pred_check
        _
      $region22: #{tpu_custom_call.1} parent=5 // pred_check_branch
        %126 = sbr.rel (%p123) target = $region24
      $region23: #{tpu_custom_call.1} parent=5 // pred_region
        %s127 = ssub.s32 %s13, 1
        %s128 = sand.u32 %s38, 1
        %s129 = scalar_lea.sflag [#allocation3], %s128
        %s130 = sand.u32 %s38, 1
        %s131 = smul.addr %s130, 64
        %s132 = scalar_lea.vmem [#allocation2], %s131
        // Predicated region
        $region25: #{tpu_custom_call.1} parent=23 // pred_check
          %p133 = pneg %p51
        $region26: #{tpu_custom_call.1} parent=23 // pred_check_branch
          %135 = sbr.rel (%p133) target = $region28
        $region27: #{tpu_custom_call.1} parent=23 // pred_region
          %137 = dma.done %s129, 1024
        $region28: #{tpu_custom_call.1} parent=23 // pred_fallthru
          _
        %s138 = sand.u32 %s38, 1
        %s139 = scalar_lea.sflag [#allocation3], %s138
        %s140 = sand.u32 %s38, 1
        %s141 = smul.addr %s140, 64
        %s142 = scalar_lea.vmem [#allocation2], %s141
        %p143 = pneg %p51
        %p144 = pneg %p48
        %p145 = pneg %p79
        %p146 = pneg %p76
        %s147 = sand.u32 %s66, 1
        %s148 = scalar_lea.sflag [#allocation4], %s147
        %s149 = sand.u32 %s66, 1
        %s150 = smul.addr %s149, 256
        %s151 = scalar_lea.vmem [#allocation5], %s150
        %s152 = smul.u32 4, %s22
        %s153 = smul.u32 4, %s22
        %s154 = smul.u32 4, %s23
        %v155 = vld [vmem:[%s132] sm:$0xff]
        %v156 = vld [vmem:[%s132 + $0x8] sm:$0xff]
        %v157 = vld [vmem:[%s132 + $0x10] sm:$0xff]
        %v158 = vld [vmem:[%s132 + $0x18] sm:$0xff]
        %v159 = vld [vmem:[%s132 + $0x20] sm:$0xff]
        %v160 = vld [vmem:[%s132 + $0x28] sm:$0xff]
        %v161 = vld [vmem:[%s132 + $0x30] sm:$0xff]
        %v162 = vld [vmem:[%s132 + $0x38] sm:$0xff]
        %171 = vrot.lane.b32.xlu0 %v155, 16
        %v172 = vpop.permute.xlu0 %171
        %173 = vrot.lane.b32.xlu0 %v156, 16
        %v174 = vpop.permute.xlu0 %173
        %175 = vrot.lane.b32.xlu0 %v157, 16
        %v176 = vpop.permute.xlu0 %175
        %177 = vrot.lane.b32.xlu0 %v158, 16
        %v178 = vpop.permute.xlu0 %177
        %179 = vrot.lane.b32.xlu0 %v159, 16
        %v180 = vpop.permute.xlu0 %179
        %181 = vrot.lane.b32.xlu0 %v160, 16
        %v182 = vpop.permute.xlu0 %181
        %183 = vrot.lane.b32.xlu0 %v161, 16
        %v184 = vpop.permute.xlu0 %183
        %185 = vrot.lane.b32.xlu0 %v162, 16
        %v186 = vpop.permute.xlu0 %185
        %195 = vrot.lane.b32.xlu0 %v155, 32
        %v196 = vpop.permute.xlu0 %195
        %197 = vrot.lane.b32.xlu0 %v156, 32
        %v198 = vpop.permute.xlu0 %197
        %199 = vrot.lane.b32.xlu0 %v157, 32
        %v200 = vpop.permute.xlu0 %199
        %201 = vrot.lane.b32.xlu0 %v158, 32
        %v202 = vpop.permute.xlu0 %201
        %203 = vrot.lane.b32.xlu0 %v159, 32
        %v204 = vpop.permute.xlu0 %203
        %205 = vrot.lane.b32.xlu0 %v160, 32
        %v206 = vpop.permute.xlu0 %205
        %207 = vrot.lane.b32.xlu0 %v161, 32
        %v208 = vpop.permute.xlu0 %207
        %209 = vrot.lane.b32.xlu0 %v162, 32
        %v210 = vpop.permute.xlu0 %209
        %219 = vrot.lane.b32.xlu0 %v155, 48
        %v220 = vpop.permute.xlu0 %219
        %221 = vrot.lane.b32.xlu0 %v156, 48
        %v222 = vpop.permute.xlu0 %221
        %223 = vrot.lane.b32.xlu0 %v157, 48
        %v224 = vpop.permute.xlu0 %223
        %225 = vrot.lane.b32.xlu0 %v158, 48
        %v226 = vpop.permute.xlu0 %225
        %227 = vrot.lane.b32.xlu0 %v159, 48
        %v228 = vpop.permute.xlu0 %227
        %229 = vrot.lane.b32.xlu0 %v160, 48
        %v230 = vpop.permute.xlu0 %229
        %231 = vrot.lane.b32.xlu0 %v161, 48
        %v232 = vpop.permute.xlu0 %231
        %233 = vrot.lane.b32.xlu0 %v162, 48
        %v234 = vpop.permute.xlu0 %233
        %vm243 = vcmask 130048
        %v244 = vsel %vm243, %v155, %v172
        %v245 = vsel %vm243, %v156, %v174
        %v246 = vsel %vm243, %v157, %v176
        %v247 = vsel %vm243, %v158, %v178
        %v248 = vsel %vm243, %v159, %v180
        %v249 = vsel %vm243, %v160, %v182
        %v250 = vsel %vm243, %v161, %v184
        %v251 = vsel %vm243, %v162, %v186
        %vm252 = vcmask 261120
        %v253 = vsel %vm252, %v244, %v196
        %v254 = vsel %vm252, %v245, %v198
        %v255 = vsel %vm252, %v246, %v200
        %v256 = vsel %vm252, %v247, %v202
        %v257 = vsel %vm252, %v248, %v204
        %v258 = vsel %vm252, %v249, %v206
        %v259 = vsel %vm252, %v250, %v208
        %v260 = vsel %vm252, %v251, %v210
        %vm261 = vcmask 392192
        %v262 = vsel %vm261, %v253, %v220
        %v263 = vsel %vm261, %v254, %v222
        %v264 = vsel %vm261, %v255, %v224
        %v265 = vsel %vm261, %v256, %v226
        %v266 = vsel %vm261, %v257, %v228
        %v267 = vsel %vm261, %v258, %v230
        %v268 = vsel %vm261, %v259, %v232
        %v269 = vsel %vm261, %v260, %v234
        %vm270 = vcmask 523264
        %271 = vst.msk [vmem:[%s151] sm:$0xff] %vm270, %v262
        %272 = vst.msk [vmem:[%s151 + $0x8] sm:$0xff] %vm270, %v263
        %273 = vst.msk [vmem:[%s151 + $0x10] sm:$0xff] %vm270, %v262
        %274 = vst.msk [vmem:[%s151 + $0x18] sm:$0xff] %vm270, %v263
        %275 = vst.msk [vmem:[%s151 + $0x20] sm:$0xff] %vm270, %v262
        %276 = vst.msk [vmem:[%s151 + $0x28] sm:$0xff] %vm270, %v263
        %277 = vst.msk [vmem:[%s151 + $0x30] sm:$0xff] %vm270, %v262
        %278 = vst.msk [vmem:[%s151 + $0x38] sm:$0xff] %vm270, %v263
        %279 = vst.msk [vmem:[%s151 + $0x40] sm:$0xff] %vm270, %v264
        %280 = vst.msk [vmem:[%s151 + $0x48] sm:$0xff] %vm270, %v265
        %281 = vst.msk [vmem:[%s151 + $0x50] sm:$0xff] %vm270, %v264
        %282 = vst.msk [vmem:[%s151 + $0x58] sm:$0xff] %vm270, %v265
        %283 = vst.msk [vmem:[%s151 + $0x60] sm:$0xff] %vm270, %v264
        %284 = vst.msk [vmem:[%s151 + $0x68] sm:$0xff] %vm270, %v265
        %285 = vst.msk [vmem:[%s151 + $0x70] sm:$0xff] %vm270, %v264
        %286 = vst.msk [vmem:[%s151 + $0x78] sm:$0xff] %vm270, %v265
        %287 = vst.msk [vmem:[%s151 + $0x80] sm:$0xff] %vm270, %v266
        %288 = vst.msk [vmem:[%s151 + $0x88] sm:$0xff] %vm270, %v267
        %289 = vst.msk [vmem:[%s151 + $0x90] sm:$0xff] %vm270, %v266
        %290 = vst.msk [vmem:[%s151 + $0x98] sm:$0xff] %vm270, %v267
        %291 = vst.msk [vmem:[%s151 + $0xa0] sm:$0xff] %vm270, %v266
        %292 = vst.msk [vmem:[%s151 + $0xa8] sm:$0xff] %vm270, %v267
        %293 = vst.msk [vmem:[%s151 + $0xb0] sm:$0xff] %vm270, %v266
        %294 = vst.msk [vmem:[%s151 + $0xb8] sm:$0xff] %vm270, %v267
        %295 = vst.msk [vmem:[%s151 + $0xc0] sm:$0xff] %vm270, %v268
        %296 = vst.msk [vmem:[%s151 + $0xc8] sm:$0xff] %vm270, %v269
        %297 = vst.msk [vmem:[%s151 + $0xd0] sm:$0xff] %vm270, %v268
        %298 = vst.msk [vmem:[%s151 + $0xd8] sm:$0xff] %vm270, %v269
        %299 = vst.msk [vmem:[%s151 + $0xe0] sm:$0xff] %vm270, %v268
        %300 = vst.msk [vmem:[%s151 + $0xe8] sm:$0xff] %vm270, %v269
        %301 = vst.msk [vmem:[%s151 + $0xf0] sm:$0xff] %vm270, %v268
        %302 = vst.msk [vmem:[%s151 + $0xf8] sm:$0xff] %vm270, %v269
        %s303 = sand.u32 %s66, 1
        %s304 = scalar_lea.sflag [#allocation4], %s303
        %s305 = sand.u32 %s66, 1
        %s306 = smul.addr %s305, 256
        %s307 = scalar_lea.vmem [#allocation5], %s306
        // Predicated region
        $region29: #{tpu_custom_call.1} parent=23 // pred_check
          %p308 = pneg %p76
        $region30: #{tpu_custom_call.1} parent=23 // pred_check_branch
          %310 = sbr.rel (%p308) target = $region32
        $region31: #{tpu_custom_call.1} parent=23 // pred_region
          %s311 = smul.u32 4, %s22
          %s312 = smul.u32 4, %s23
          %314 = vsyncadd %s304, 0
          %s315 = smul.addr %s312, 2
          %s316 = smul.addr %s311, 8
          %s317 = sadd.s32 %s315, %s316
          %s318 = smul.addr %s317, 8
          %s319 = scalar_lea.hbm %s1, %s318
          %s320 = sshll.u32 %s307, 4
          %s321 = int_to_ptr.vmem [resolvable:$true] %s320
          %s322 = sshll.u32 %s319, 4
          %s323 = int_to_ptr.hbm [resolvable:$true] %s322
          %328 = dma.vmem_to_hbm [thread:$0]  %s321, 4096, %s323, %s304, 128, 128, 8
        $region32: #{tpu_custom_call.1} parent=23 // pred_fallthru
          _
      $region24: #{tpu_custom_call.1} parent=5 // pred_fallthru
        _
      %p329 = scmp.le.s32.totalorder 2, %s13
      // Predicated region
      $region33: #{tpu_custom_call.1} parent=5 // pred_check
        %p330 = pneg %p329
      $region34: #{tpu_custom_call.1} parent=5 // pred_check_branch
        %332 = sbr.rel (%p330) target = $region36
      $region35: #{tpu_custom_call.1} parent=5 // pred_region
        %s333 = ssub.s32 %s13, 2
        // Predicated region
        $region37: #{tpu_custom_call.1} parent=35 // pred_check
          %p334 = pneg %p82
        $region38: #{tpu_custom_call.1} parent=35 // pred_check_branch
          %336 = sbr.rel (%p334) target = $region40
        $region39: #{tpu_custom_call.1} parent=35 // pred_region
          %s337 = sand.u32 %s67, 1
          %s338 = scalar_lea.sflag [#allocation4], %s337
          %s339 = sand.u32 %s67, 1
          %s340 = smul.addr %s339, 256
          %s341 = scalar_lea.vmem [#allocation5], %s340
          %343 = dma.done %s338, 4096
        $region40: #{tpu_custom_call.1} parent=35 // pred_fallthru
          _
      $region36: #{tpu_custom_call.1} parent=5 // pred_fallthru
        _
    $region6: #{tpu_custom_call.1} parent=1 // loop_footer
      %s17 = sadd.s32 1, %s13
    $region7: #{tpu_custom_call.1} parent=1 // loop_footer_branch
      %12 = sbr.rel target = $region3
    $region8: #{tpu_custom_call.1} parent=1 // loop_exit
      _
    %344 = vsyncpa [#allocation3], 1
    %s345 = scalar_lea.sflag [#allocation3], 1
    %346 = vsyncpa %s345, 1
    %347 = vsyncpa [#allocation4], 1
    %s348 = scalar_lea.sflag [#allocation4], 1
    %349 = vsyncpa %s348, 1

</llo_original>
